<compile_context>
chip_gen: v7x
topology: tpu7x:2x2x1
jax: 0.10.0
libtpu: 0.0.40
codegen_flags: <defaults>
</compile_context>

<pallas_src>
import functools

import jax
import jax.numpy as jnp
from jax.experimental import pallas as pl
from jax.experimental.pallas import tpu as pltpu


def _round_up(x, m):
    return (x + m - 1) // m * m


# ----------------------------- Pallas kernels ------------------------------

def _conv_caps_kernel(w_ref, p_ref, b_ref, o_ref, acc_ref):
    """One (batch b, K-tile k) grid step of  out[b] = W @ patchesT[b] + bias.

    w_ref:   [C_out, tk]    bf16  (K-tile k of the flattened conv weight)
    p_ref:   [1, tk, P]     bf16  (K-tile k of batch b's im2col patches^T)
    b_ref:   [C_out, 1]     f32   (conv bias)
    o_ref:   [1, C_out, P]  f32   (conv output, NCHW-flat order per batch)
    acc_ref: [C_out, P]     f32   (VMEM accumulator, persists across k)
    """
    k = pl.program_id(1)

    @pl.when(k == 0)
    def _():
        acc_ref[...] = jnp.zeros_like(acc_ref)

    acc_ref[...] += jnp.dot(w_ref[...], p_ref[0],
                            preferred_element_type=jnp.float32)

    @pl.when(k == pl.num_programs(1) - 1)
    def _():
        o_ref[0] = acc_ref[...] + b_ref[...]


def _squash_kernel(s_ref, o_ref):
    """squash over the capsule (last) dim:  s / (1 + ||s||^2) * ||s||.

    s_ref / o_ref: [1, Ncaps, D] f32 (one batch element per grid step).
    """
    s = s_ref[0]
    norm_sq = jnp.sum(s * s, axis=-1, keepdims=True)
    norm = jnp.sqrt(norm_sq)
    # divide -> EUP reciprocal (approx), keeping the epilogue off the VPU slot
    scale = norm * pl.reciprocal(1.0 + norm_sq, approx=True)
    o_ref[0] = s * scale


# ------------------------------- JAX wrapper --------------------------------

def _im2col_t(x, kernel, stride):
    """x: [B, C, H, W] -> transposed patches [B, C*k*k, Ho*Wo].

    K ordering is (c, kh, kw), matching PyTorch's conv-weight flattening.
    """
    B, C, H, W = x.shape
    Ho = (H - kernel) // stride + 1
    Wo = (W - kernel) // stride + 1
    cols = []
    for kh in range(kernel):
        for kw in range(kernel):
            cols.append(
                x[:, :, kh:kh + stride * Ho:stride, kw:kw + stride * Wo:stride])
    cols = jnp.stack(cols, axis=2)                  # [B, C, k*k, Ho, Wo]
    return cols.reshape(B, C * kernel * kernel, Ho * Wo), Ho, Wo


def primary_caps_forward(x, conv_w, conv_b, *, stride, kernel, in_capsule_dim):
    """x: [B, C_in, H, W] (NCHW, like PyTorch). Returns [B, Ncaps, D] f32."""
    B, C_in, H, W = x.shape
    C_out = conv_w.shape[0]
    K = C_in * kernel * kernel

    # TODO(synk): for real CapsNet sizes (C_in=256, 9x9 kernel) keep the k*k
    # im2col expansion inside the kernel (memory_space=pl.ANY + manual strided
    # DMA) instead of materializing it k^2-fold in HBM.
    patches_t, Ho, Wo = _im2col_t(x, kernel, stride)      # [B, K, P] f32
    P = Ho * Wo

    # K tiling: pad the contraction dim to whole MXU-friendly tiles; cast the
    # matmul operands to bf16 (accumulation stays f32).
    tk = 512 if K > 512 else _round_up(K, 128)
    K_pad = _round_up(K, tk)
    nk = K_pad // tk

    patches_t = jnp.pad(patches_t, ((0, 0), (0, K_pad - K), (0, 0)))
    patches_t = patches_t.astype(jnp.bfloat16)
    w_mat = jnp.pad(conv_w.reshape(C_out, K), ((0, 0), (0, K_pad - K)))
    w_mat = w_mat.astype(jnp.bfloat16)
    b_mat = conv_b.reshape(C_out, 1).astype(jnp.float32)

    conv_out = pl.pallas_call(
        _conv_caps_kernel,
        out_shape=jax.ShapeDtypeStruct((B, C_out, P), jnp.float32),
        grid_spec=pltpu.PrefetchScalarGridSpec(
            num_scalar_prefetch=0,
            grid=(B, nk),
            in_specs=[
                pl.BlockSpec((C_out, tk), lambda b, k: (0, k)),
                pl.BlockSpec((1, tk, P), lambda b, k: (b, k, 0)),
                pl.BlockSpec((C_out, 1), lambda b, k: (0, 0)),
            ],
            out_specs=pl.BlockSpec((1, C_out, P), lambda b, k: (b, 0, 0)),
            scratch_shapes=[pltpu.VMEM((C_out, P), jnp.float32)],
        ),
        compiler_params=pltpu.CompilerParams(
            dimension_semantics=("parallel", "arbitrary")),
    )(w_mat, patches_t, b_mat)

    # Free contiguous reshape: [B, C_out, Ho*Wo] -> [B, Ncaps, D].  This is
    # exactly PyTorch's x.view(B, -1, D) on the NCHW conv output (capsules are
    # groups of D consecutive elements in (c, h, w) row-major order, crossing
    # channel boundaries when Ho*Wo is not a multiple of D).
    caps = conv_out.reshape(B, -1, in_capsule_dim)
    n_caps = caps.shape[1]

    out = pl.pallas_call(
        _squash_kernel,
        out_shape=jax.ShapeDtypeStruct(caps.shape, jnp.float32),
        grid=(B,),
        in_specs=[pl.BlockSpec((1, n_caps, in_capsule_dim),
                               lambda b: (b, 0, 0))],
        out_specs=pl.BlockSpec((1, n_caps, in_capsule_dim),
                               lambda b: (b, 0, 0)),
        compiler_params=pltpu.CompilerParams(
            dimension_semantics=("parallel",)),
    )(caps)
    return out


# ------------------------------ reference -----------------------------------

def _reference(x, conv_w, conv_b, *, stride, in_capsule_dim):
    conv = jax.lax.conv_general_dilated(
        x, conv_w, window_strides=(stride, stride), padding="VALID",
        dimension_numbers=("NCHW", "OIHW", "NCHW"))
    conv = conv + conv_b[None, :, None, None]
    s = conv.reshape(conv.shape[0], -1, in_capsule_dim)
    norm_sq = jnp.sum(s * s, axis=-1, keepdims=True)
    norm = jnp.sqrt(norm_sq)
    return s / (1.0 + norm_sq) * norm


# --------------------------------- demo -------------------------------------

if __name__ == "__main__":
    # Small, consistent shapes: in_channels=4, stride=2, kernel=3,
    # in_capsule_dim=8, caps_unit=4 -> conv out_channels = 32.
    B, C_in, H, W = 2, 4, 16, 16
    stride, kernel = 2, 3
    in_capsule_dim, caps_unit = 8, 4
    C_out = in_capsule_dim * caps_unit

    key = jax.random.PRNGKey(0)
    k_x, k_w, k_b = jax.random.split(key, 3)

    x = jax.random.normal(k_x, (B, C_in, H, W), dtype=jnp.float32)

    # Deterministic kaiming-normal init (fan_in, gain=sqrt(2)) for conv weight.
    fan_in = C_in * kernel * kernel
    conv_w = jax.random.normal(k_w, (C_out, C_in, kernel, kernel),
                               dtype=jnp.float32) * jnp.sqrt(2.0 / fan_in)
    # PyTorch default Conv2d bias init: U(-1/sqrt(fan_in), 1/sqrt(fan_in)).
    bound = 1.0 / jnp.sqrt(fan_in)
    conv_b = jax.random.uniform(k_b, (C_out,), dtype=jnp.float32,
                                minval=-bound, maxval=bound)

    fwd = jax.jit(functools.partial(primary_caps_forward, stride=stride,
                                    kernel=kernel,
                                    in_capsule_dim=in_capsule_dim))
    out = jax.block_until_ready(fwd(x, conv_w, conv_b))

    # Sanity: Ho = Wo = (16-3)//2 + 1 = 7 -> Ncaps = 32*49/8 = 196.
    Ho = (H - kernel) // stride + 1
    assert out.shape == (B, C_out * Ho * Ho // in_capsule_dim, in_capsule_dim)
    assert bool(jnp.all(jnp.isfinite(out)))

    # Numerical check against a plain-JAX/XLA reference (loose tolerance:
    # bf16 matmul operands + approx EUP reciprocal in the squash).
    ref = _reference(x, conv_w, conv_b, stride=stride,
                     in_capsule_dim=in_capsule_dim)
    max_err = float(jnp.max(jnp.abs(out - ref)))
    assert max_err < 0.1, f"max abs error vs reference too large: {max_err}"

    print("KERNEL_OK")
</pallas_src>

<mosaic_0001>
module attributes {stable_mosaic.version = 11 : i64} {
  func.func @_squash_kernel(%arg0: i32, %arg1: memref<1x196x8xf32, #tpu.memory_space<vmem>>, %arg2: memref<1x196x8xf32, #tpu.memory_space<vmem>>) attributes {dimension_semantics = [#tpu.dimension_semantics<parallel>], iteration_bounds = array<i64: 2>, scalar_prefetch = 0 : i64, scratch_operands = 0 : i64, tpu.core_type = #tpu.core_type<tc>, window_params = [{transform_indices = @transform_0, window_bounds = array<i64: 1, 196, 8>}, {transform_indices = @transform_1, window_bounds = array<i64: 1, 196, 8>}]} {
    %c0 = arith.constant 0 : index
    %c0_0 = arith.constant 0 : index
    %c0_1 = arith.constant 0 : index
    %0 = vector.load %arg1[%c0, %c0_0, %c0_1] : memref<1x196x8xf32, #tpu.memory_space<vmem>>, vector<1x196x8xf32>
    %1 = vector.shape_cast %0 : vector<1x196x8xf32> to vector<196x8xf32>
    %2 = arith.mulf %1, %1 : vector<196x8xf32>
    %cst = arith.constant dense<0.000000e+00> : vector<196xf32>
    %3 = vector.multi_reduction <add>, %2, %cst [1] : vector<196x8xf32> to vector<196xf32>
    %4 = vector.shape_cast %3 : vector<196xf32> to vector<196x1xf32>
    %5 = math.sqrt %4 : vector<196x1xf32>
    %cst_2 = arith.constant 1.000000e+00 : f32
    %6 = vector.broadcast %cst_2 : f32 to vector<196x1xf32>
    %7 = arith.addf %6, %4 : vector<196x1xf32>
    %8 = tpu.reciprocal %7 {approx = true} : vector<196x1xf32> -> vector<196x1xf32>
    %9 = arith.mulf %5, %8 : vector<196x1xf32>
    %10 = vector.broadcast %9 : vector<196x1xf32> to vector<196x8xf32>
    %11 = arith.mulf %1, %10 : vector<196x8xf32>
    %c0_3 = arith.constant 0 : index
    %c0_4 = arith.constant 0 : index
    %c0_5 = arith.constant 0 : index
    %12 = vector.load %arg2[%c0_3, %c0_4, %c0_5] : memref<1x196x8xf32, #tpu.memory_space<vmem>>, vector<1x196x8xf32>
    %13 = vector.shape_cast %12 : vector<1x196x8xf32> to vector<196x8xf32>
    %14 = vector.shape_cast %11 : vector<196x8xf32> to vector<1x196x8xf32>
    tpu.vector_store %arg2[%c0_3, %c0_4, %c0_5], %14 {strides = array<i32>} : memref<1x196x8xf32, #tpu.memory_space<vmem>>, vector<1x196x8xf32>,
    return
  }
  func.func @transform_0(%arg0: i32) -> (i32, i32, i32) {
    %c0_i32 = arith.constant 0 : i32
    %c0_i32_0 = arith.constant 0 : i32
    %c0_i32_1 = arith.constant 0 : i32
    return %arg0, %c0_i32, %c0_i32_0 : i32, i32, i32
  }
  func.func @transform_1(%arg0: i32) -> (i32, i32, i32) {
    %c0_i32 = arith.constant 0 : i32
    %c0_i32_0 = arith.constant 0 : i32
    %c0_i32_1 = arith.constant 0 : i32
    return %arg0, %c0_i32, %c0_i32_0 : i32, i32, i32
  }
}

module attributes {stable_mosaic.version = 11 : i64} {
  func.func @_conv_caps_kernel(%arg0: i32, %arg1: i32, %arg2: memref<32x128xbf16, #tpu.memory_space<vmem>>, %arg3: memref<1x128x49xbf16, #tpu.memory_space<vmem>>, %arg4: memref<32x1xf32, #tpu.memory_space<vmem>>, %arg5: memref<1x32x49xf32, #tpu.memory_space<vmem>>, %arg6: memref<32x49xf32, #tpu.memory_space<vmem>>) attributes {dimension_semantics = [#tpu.dimension_semantics<parallel>, #tpu.dimension_semantics<arbitrary>], iteration_bounds = array<i64: 2, 1>, scalar_prefetch = 0 : i64, scratch_operands = 1 : i64, tpu.core_type = #tpu.core_type<tc>, window_params = [{transform_indices = @transform_0, window_bounds = array<i64: 32, 128>}, {transform_indices = @transform_1, window_bounds = array<i64: 1, 128, 49>}, {pipeline_mode = #tpu.pipeline_mode<synchronous>, transform_indices = @transform_2, window_bounds = array<i64: 32, 1>}, {transform_indices = @transform_3, window_bounds = array<i64: 1, 32, 49>}]} {
    %c0_i32 = arith.constant 0 : i32
    %0 = arith.cmpi eq, %arg1, %c0_i32 : i32
    %1 = arith.extui %0 : i1 to i32
    %c0_i32_0 = arith.constant 0 : i32
    %2 = arith.cmpi ne, %1, %c0_i32_0 : i32
    scf.if %2 {
      %cst_11 = arith.constant 0.000000e+00 : f32
      %13 = vector.broadcast %cst_11 : f32 to vector<32x49xf32>
      %c0_12 = arith.constant 0 : index
      %c0_13 = arith.constant 0 : index
      %14 = vector.load %arg6[%c0_12, %c0_13] : memref<32x49xf32, #tpu.memory_space<vmem>>, vector<32x49xf32>
      tpu.vector_store %arg6[%c0_12, %c0_13], %13 {strides = array<i32>} : memref<32x49xf32, #tpu.memory_space<vmem>>, vector<32x49xf32>,
    } else {
    }
    %c0 = arith.constant 0 : index
    %c0_1 = arith.constant 0 : index
    %3 = vector.load %arg6[%c0, %c0_1] : memref<32x49xf32, #tpu.memory_space<vmem>>, vector<32x49xf32>
    %c0_2 = arith.constant 0 : index
    %c0_3 = arith.constant 0 : index
    %4 = vector.load %arg2[%c0_2, %c0_3] : memref<32x128xbf16, #tpu.memory_space<vmem>>, vector<32x128xbf16>
    %c0_4 = arith.constant 0 : index
    %c0_5 = arith.constant 0 : index
    %c0_6 = arith.constant 0 : index
    %5 = vector.load %arg3[%c0_4, %c0_5, %c0_6] : memref<1x128x49xbf16, #tpu.memory_space<vmem>>, vector<1x128x49xbf16>
    %6 = vector.shape_cast %5 : vector<1x128x49xbf16> to vector<128x49xbf16>
    %cst = arith.constant dense<0.000000e+00> : vector<32x49xf32>
    %7 = tpu.matmul %4, %6, %cst {dimension_numbers = #tpu.dot_dimension_numbers<[1], [0], [0], [1], [0, 0, 1, 1], [], []>} : vector<32x128xbf16>, vector<128x49xbf16>, vector<32x49xf32> -> vector<32x49xf32>
    %8 = arith.addf %3, %7 : vector<32x49xf32>
    %c0_7 = arith.constant 0 : index
    %c0_8 = arith.constant 0 : index
    %9 = vector.load %arg6[%c0_7, %c0_8] : memref<32x49xf32, #tpu.memory_space<vmem>>, vector<32x49xf32>
    tpu.vector_store %arg6[%c0_7, %c0_8], %8 {strides = array<i32>} : memref<32x49xf32, #tpu.memory_space<vmem>>, vector<32x49xf32>,
    %c0_i32_9 = arith.constant 0 : i32
    %10 = arith.cmpi eq, %arg1, %c0_i32_9 : i32
    %11 = arith.extui %10 : i1 to i32
    %c0_i32_10 = arith.constant 0 : i32
    %12 = arith.cmpi ne, %11, %c0_i32_10 : i32
    scf.if %12 {
      %c0_11 = arith.constant 0 : index
      %c0_12 = arith.constant 0 : index
      %13 = vector.load %arg6[%c0_11, %c0_12] : memref<32x49xf32, #tpu.memory_space<vmem>>, vector<32x49xf32>
      %c0_13 = arith.constant 0 : index
      %c0_14 = arith.constant 0 : index
      %14 = vector.load %arg4[%c0_13, %c0_14] : memref<32x1xf32, #tpu.memory_space<vmem>>, vector<32x1xf32>
      %15 = vector.broadcast %14 : vector<32x1xf32> to vector<32x49xf32>
      %16 = arith.addf %13, %15 : vector<32x49xf32>
      %c0_15 = arith.constant 0 : index
      %c0_16 = arith.constant 0 : index
      %c0_17 = arith.constant 0 : index
      %17 = vector.load %arg5[%c0_15, %c0_16, %c0_17] : memref<1x32x49xf32, #tpu.memory_space<vmem>>, vector<1x32x49xf32>
      %18 = vector.shape_cast %17 : vector<1x32x49xf32> to vector<32x49xf32>
      %19 = vector.shape_cast %16 : vector<32x49xf32> to vector<1x32x49xf32>
      tpu.vector_store %arg5[%c0_15, %c0_16, %c0_17], %19 {strides = array<i32>} : memref<1x32x49xf32, #tpu.memory_space<vmem>>, vector<1x32x49xf32>,
    } else {
    }
    return
  }
  func.func @transform_0(%arg0: i32, %arg1: i32) -> (i32, i32) {
    %c0_i32 = arith.constant 0 : i32
    %c0_i32_0 = arith.constant 0 : i32
    return %c0_i32, %arg1 : i32, i32
  }
  func.func @transform_1(%arg0: i32, %arg1: i32) -> (i32, i32, i32) {
    %c0_i32 = arith.constant 0 : i32
    %c0_i32_0 = arith.constant 0 : i32
    return %arg0, %arg1, %c0_i32 : i32, i32, i32
  }
  func.func @transform_2(%arg0: i32, %arg1: i32) -> (i32, i32) {
    %c0_i32 = arith.constant 0 : i32
    %c0_i32_0 = arith.constant 0 : i32
    %c0_i32_1 = arith.constant 0 : i32
    return %c0_i32, %c0_i32_0 : i32, i32
  }
  func.func @transform_3(%arg0: i32, %arg1: i32) -> (i32, i32, i32) {
    %c0_i32 = arith.constant 0 : i32
    %c0_i32_0 = arith.constant 0 : i32
    %c0_i32_1 = arith.constant 0 : i32
    return %arg0, %c0_i32, %c0_i32_0 : i32, i32, i32
  }
}

</mosaic_0001>

<llo_original>
// kernel: primary_caps_forward.3
$region0: #{primary_caps_forward.3}
  #allocation0 [shape = 'u32[]', space=smem, size = 0x4, offset = 0x4, fixed_abs, tag = 'smem constant byte address 0x4 - core index']
  #allocation1 [shape = 'u32[144,128]{1,0:T(1,128)}', space=vmem, size = 0x12000, scoped, tag = 'internal scratch']
  %s0 = inlined_call_operand.vmem [shape: f32[2,196,8], index: 0, kind: input, shape index: {}]
  %s1 = inlined_call_operand.vmem [shape: f32[2,196,8], index: 1, kind: output, shape index: {}]
  %s2 = sld [smem:[#allocation0]]
  $region37: #{primary_caps_forward.3} parent=0
    _
  %s4 = ssub.s32 1, %s2
  %s5 = scalar_select 0, %s4, %s2
  loop: start=0, step=1, limit=4
  $region2: #{primary_caps_forward.3} parent=0 // loop_pre_header
    _
  $region3: #{primary_caps_forward.3} parent=0 // loop_header
    %s7 = sphi 0, %s11
    %p8 = scmp.ge.s32.totalorder %s7, 4
    %s17 = sphi 0, %s19
    %s20 = sphi 0, %s17
    %s21 = sphi 0, %s20
    %s37 = sphi 0, %s21
    %s43 = sphi 0, %s45
    %s46 = sphi 0, %s43
    %s47 = sphi 0, %s46
    %s63 = sphi 0, %s47
  $region4: #{primary_caps_forward.3} parent=0 // loop_header_branch
    %10 = sbr.rel (%p8) target = $region8
  $region5: #{primary_caps_forward.3} parent=0 // loop_body
    %s12 = ssub.s32 %s7, 1
    %s13 = ssub.s32 %s7, 2
    %s14 = sadd.s32 %s7, 1
    %s15 = ssub.s32 %s7, %s14
    %p16 = scmp.eq.s32.totalorder %s15, 0
    %s18 = sadd.s32 %s17, 1
    %s19 = scalar_select %p16, %s17, %s18
    %p22 = pneg %p16
    %p23 = scmp.eq.s32.totalorder %s7, 1
    %p24 = por %p22, %p23
    %p25 = scmp.ne.s32.totalorder %s17, %s20
    %p26 = scmp.eq.s32.totalorder %s7, 0
    %p27 = por %p25, %p26
    %p28 = scmp.ne.s32.totalorder %s17, %s20
    %p29 = scmp.eq.s32.totalorder %s12, 1
    %p30 = por %p28, %p29
    %p31 = scmp.ne.s32.totalorder %s20, %s21
    %p32 = scmp.eq.s32.totalorder %s12, 0
    %p33 = por %p31, %p32
    %p34 = scmp.ne.s32.totalorder %s20, %s21
    %p35 = scmp.eq.s32.totalorder %s13, 1
    %p36 = por %p34, %p35
    %p38 = scmp.ne.s32.totalorder %s21, %s37
    %p39 = scmp.eq.s32.totalorder %s13, 0
    %p40 = por %p38, %p39
    %s41 = ssub.s32 %s7, %s14
    %p42 = scmp.eq.s32.totalorder %s41, 0
    %s44 = sadd.s32 %s43, 1
    %s45 = scalar_select %p42, %s43, %s44
    %p48 = pneg %p42
    %p49 = scmp.eq.s32.totalorder %s7, 1
    %p50 = por %p48, %p49
    %p51 = scmp.ne.s32.totalorder %s43, %s46
    %p52 = scmp.eq.s32.totalorder %s7, 0
    %p53 = por %p51, %p52
    %p54 = scmp.ne.s32.totalorder %s43, %s46
    %p55 = scmp.eq.s32.totalorder %s12, 1
    %p56 = por %p54, %p55
    %p57 = scmp.ne.s32.totalorder %s46, %s47
    %p58 = scmp.eq.s32.totalorder %s12, 0
    %p59 = por %p57, %p58
    %p60 = scmp.ne.s32.totalorder %s46, %s47
    %p61 = scmp.eq.s32.totalorder %s13, 1
    %p62 = por %p60, %p61
    %p64 = scmp.ne.s32.totalorder %s47, %s63
    %p65 = scmp.eq.s32.totalorder %s13, 0
    %p66 = por %p64, %p65
    %p67 = scmp.le.s32.totalorder 1, %s7
    %p68 = scmp.lt.s32.totalorder %s7, 3
    %p69 = pnand %p67, %p68
    %p70 = pneg %p69
    // Predicated region
    $region9: #{primary_caps_forward.3} parent=5 // pred_check
      _
    $region10: #{primary_caps_forward.3} parent=5 // pred_check_branch
      %72 = sbr.rel (%p69) target = $region12
    $region11: #{primary_caps_forward.3} parent=5 // pred_region
      %s73 = ssub.s32 %s7, 1
    $region12: #{primary_caps_forward.3} parent=5 // pred_fallthru
      _
    %p74 = scmp.lt.s32.totalorder %s7, 2
    // Predicated region
    $region13: #{primary_caps_forward.3} parent=5 // pred_check
      %p75 = pneg %p74
    $region14: #{primary_caps_forward.3} parent=5 // pred_check_branch
      %77 = sbr.rel (%p75) target = $region16
    $region15: #{primary_caps_forward.3} parent=5 // pred_region
      // Predicated region
      $region17: #{primary_caps_forward.3} parent=15 // pred_check
        %p78 = pneg %p27
      $region18: #{primary_caps_forward.3} parent=15 // pred_check_branch
        %80 = sbr.rel (%p78) target = $region20
      $region19: #{primary_caps_forward.3} parent=15 // pred_region
        %p81 = scmp.lt.s32.totalorder %s7, 1
        %s82 = scalar_select %p81, %s7, 1
        %s83 = smul.addr %s82, 25
        %s84 = smul.addr %s83, 8
        %s85 = scalar_lea.vmem %s0, %s84
      $region20: #{primary_caps_forward.3} parent=15 // pred_fallthru
        _
    $region16: #{primary_caps_forward.3} parent=5 // pred_fallthru
      _
    %p86 = scmp.le.s32.totalorder 1, %s7
    %p87 = scmp.lt.s32.totalorder %s7, 3
    %p88 = pnand %p86, %p87
    %p89 = pneg %p88
    // Predicated region
    $region21: #{primary_caps_forward.3} parent=5 // pred_check
      _
    $region22: #{primary_caps_forward.3} parent=5 // pred_check_branch
      %91 = sbr.rel (%p88) target = $region24
    $region23: #{primary_caps_forward.3} parent=5 // pred_region
      %s92 = ssub.s32 %s7, 1
      %p93 = scmp.lt.s32.totalorder %s12, 1
      %s94 = scalar_select %p93, %s12, 1
      %s95 = smul.addr %s94, 25
      %s96 = smul.addr %s95, 8
      %s97 = scalar_lea.vmem %s0, %s96
      %p98 = pneg %p33
      %p99 = pneg %p30
      %p100 = pneg %p59
      %p101 = pneg %p56
      %p102 = scmp.lt.s32.totalorder %s12, 1
      %s103 = scalar_select %p102, %s12, 1
      %s104 = smul.addr %s103, 25
      %s105 = smul.addr %s104, 8
      %s106 = scalar_lea.vmem %s1, %s105
      %p107 = scmp.lt.s32.totalorder %s12, 1
      %s108 = scalar_select %p107, %s12, 1
      %s109 = smul.addr %s108, 25
      %s110 = smul.addr %s109, 8
      %s111 = scalar_lea.vmem %s0, %s110
      %p112 = scmp.lt.s32.totalorder %s12, 1
      %s113 = scalar_select %p112, %s12, 1
      %s114 = smul.addr %s113, 25
      %s115 = smul.addr %s114, 8
      %s116 = scalar_lea.vmem %s1, %s115
      %v117 = vld [vmem:[%s111] sm:$0xff]
      %v118 = vld [vmem:[%s111 + $0x8] sm:$0xff]
      %v119 = vld [vmem:[%s111 + $0x10] sm:$0xff]
      %v120 = vld [vmem:[%s111 + $0x18] sm:$0xff]
      %v121 = vld [vmem:[%s111 + $0x20] sm:$0xff]
      %v122 = vld [vmem:[%s111 + $0x28] sm:$0xff]
      %v123 = vld [vmem:[%s111 + $0x30] sm:$0xff]
      %v124 = vld [vmem:[%s111 + $0x38] sm:$0xff]
      %v125 = vld [vmem:[%s111 + $0x40] sm:$0xff]
      %v126 = vld [vmem:[%s111 + $0x48] sm:$0xff]
      %v127 = vld [vmem:[%s111 + $0x50] sm:$0xff]
      %v128 = vld [vmem:[%s111 + $0x58] sm:$0xff]
      %v129 = vld [vmem:[%s111 + $0x60] sm:$0xff]
      %v130 = vld [vmem:[%s111 + $0x68] sm:$0xff]
      %v131 = vld [vmem:[%s111 + $0x70] sm:$0xff]
      %v132 = vld [vmem:[%s111 + $0x78] sm:$0xff]
      %v133 = vld [vmem:[%s111 + $0x80] sm:$0xff]
      %v134 = vld [vmem:[%s111 + $0x88] sm:$0xff]
      %v135 = vld [vmem:[%s111 + $0x90] sm:$0xff]
      %v136 = vld [vmem:[%s111 + $0x98] sm:$0xff]
      %v137 = vld [vmem:[%s111 + $0xa0] sm:$0xff]
      %v138 = vld [vmem:[%s111 + $0xa8] sm:$0xff]
      %v139 = vld [vmem:[%s111 + $0xb0] sm:$0xff]
      %v140 = vld [vmem:[%s111 + $0xb8] sm:$0xff]
      %v141 = vld [vmem:[%s111 + $0xc0] sm:$0xf]
      %v142 = vmul.f32 %v117, %v117
      %v143 = vmul.f32 %v118, %v118
      %v144 = vmul.f32 %v119, %v119
      %v145 = vmul.f32 %v120, %v120
      %v146 = vmul.f32 %v121, %v121
      %v147 = vmul.f32 %v122, %v122
      %v148 = vmul.f32 %v123, %v123
      %v149 = vmul.f32 %v124, %v124
      %v150 = vmul.f32 %v125, %v125
      %v151 = vmul.f32 %v126, %v126
      %v152 = vmul.f32 %v127, %v127
      %v153 = vmul.f32 %v128, %v128
      %v154 = vmul.f32 %v129, %v129
      %v155 = vmul.f32 %v130, %v130
      %v156 = vmul.f32 %v131, %v131
      %v157 = vmul.f32 %v132, %v132
      %v158 = vmul.f32 %v133, %v133
      %v159 = vmul.f32 %v134, %v134
      %v160 = vmul.f32 %v135, %v135
      %v161 = vmul.f32 %v136, %v136
      %v162 = vmul.f32 %v137, %v137
      %v163 = vmul.f32 %v138, %v138
      %v164 = vmul.f32 %v139, %v139
      %v165 = vmul.f32 %v140, %v140
      %v166 = vmul.f32 %v141, %v141
      %vm167 = vcmask 64512
      %v168 = vsel %vm167, %v142, 0.0
      %169 = vadd.xlane.f32.xlu0 %v168
      %v170 = vpop.xlane.xlu0 %169
      %v171 = vsel %vm167, %v143, 0.0
      %172 = vadd.xlane.f32.xlu0 %v171
      %v173 = vpop.xlane.xlu0 %172
      %v174 = vsel %vm167, %v144, 0.0
      %175 = vadd.xlane.f32.xlu0 %v174
      %v176 = vpop.xlane.xlu0 %175
      %v177 = vsel %vm167, %v145, 0.0
      %178 = vadd.xlane.f32.xlu0 %v177
      %v179 = vpop.xlane.xlu0 %178
      %v180 = vsel %vm167, %v146, 0.0
      %181 = vadd.xlane.f32.xlu0 %v180
      %v182 = vpop.xlane.xlu0 %181
      %v183 = vsel %vm167, %v147, 0.0
      %184 = vadd.xlane.f32.xlu0 %v183
      %v185 = vpop.xlane.xlu0 %184
      %v186 = vsel %vm167, %v148, 0.0
      %187 = vadd.xlane.f32.xlu0 %v186
      %v188 = vpop.xlane.xlu0 %187
      %v189 = vsel %vm167, %v149, 0.0
      %190 = vadd.xlane.f32.xlu0 %v189
      %v191 = vpop.xlane.xlu0 %190
      %v192 = vsel %vm167, %v150, 0.0
      %193 = vadd.xlane.f32.xlu0 %v192
      %v194 = vpop.xlane.xlu0 %193
      %v195 = vsel %vm167, %v151, 0.0
      %196 = vadd.xlane.f32.xlu0 %v195
      %v197 = vpop.xlane.xlu0 %196
      %v198 = vsel %vm167, %v152, 0.0
      %199 = vadd.xlane.f32.xlu0 %v198
      %v200 = vpop.xlane.xlu0 %199
      %v201 = vsel %vm167, %v153, 0.0
      %202 = vadd.xlane.f32.xlu0 %v201
      %v203 = vpop.xlane.xlu0 %202
      %v204 = vsel %vm167, %v154, 0.0
      %205 = vadd.xlane.f32.xlu0 %v204
      %v206 = vpop.xlane.xlu0 %205
      %v207 = vsel %vm167, %v155, 0.0
      %208 = vadd.xlane.f32.xlu0 %v207
      %v209 = vpop.xlane.xlu0 %208
      %v210 = vsel %vm167, %v156, 0.0
      %211 = vadd.xlane.f32.xlu0 %v210
      %v212 = vpop.xlane.xlu0 %211
      %v213 = vsel %vm167, %v157, 0.0
      %214 = vadd.xlane.f32.xlu0 %v213
      %v215 = vpop.xlane.xlu0 %214
      %v216 = vsel %vm167, %v158, 0.0
      %217 = vadd.xlane.f32.xlu0 %v216
      %v218 = vpop.xlane.xlu0 %217
      %v219 = vsel %vm167, %v159, 0.0
      %220 = vadd.xlane.f32.xlu0 %v219
      %v221 = vpop.xlane.xlu0 %220
      %v222 = vsel %vm167, %v160, 0.0
      %223 = vadd.xlane.f32.xlu0 %v222
      %v224 = vpop.xlane.xlu0 %223
      %v225 = vsel %vm167, %v161, 0.0
      %226 = vadd.xlane.f32.xlu0 %v225
      %v227 = vpop.xlane.xlu0 %226
      %v228 = vsel %vm167, %v162, 0.0
      %229 = vadd.xlane.f32.xlu0 %v228
      %v230 = vpop.xlane.xlu0 %229
      %v231 = vsel %vm167, %v163, 0.0
      %232 = vadd.xlane.f32.xlu0 %v231
      %v233 = vpop.xlane.xlu0 %232
      %v234 = vsel %vm167, %v164, 0.0
      %235 = vadd.xlane.f32.xlu0 %v234
      %v236 = vpop.xlane.xlu0 %235
      %v237 = vsel %vm167, %v165, 0.0
      %238 = vadd.xlane.f32.xlu0 %v237
      %v239 = vpop.xlane.xlu0 %238
      %vm240 = vcmask 60416
      %v241 = vsel %vm240, %v166, 0.0
      %242 = vadd.xlane.f32.xlu0 %v241
      %v243 = vpop.xlane.xlu0 %242
      %v244 = vrsqrt.pop %v170
      %v245 = vmul.f32 %v170, %v244
      %vm246 = vcmp.eq.f32.partialorder %v170, inf
      %v247 = vsel %vm246, %v170, %v245
      %vm248 = vcmp.eq.f32.partialorder %v170, 0.0
      %v249 = vand.u32 %v170, 2147483648
      %v250 = vsel %vm248, %v249, %v247
      %v251 = vrsqrt.pop %v173
      %v252 = vmul.f32 %v173, %v251
      %vm253 = vcmp.eq.f32.partialorder %v173, inf
      %v254 = vsel %vm253, %v173, %v252
      %vm255 = vcmp.eq.f32.partialorder %v173, 0.0
      %v256 = vand.u32 %v173, 2147483648
      %v257 = vsel %vm255, %v256, %v254
      %v258 = vrsqrt.pop %v176
      %v259 = vmul.f32 %v176, %v258
      %vm260 = vcmp.eq.f32.partialorder %v176, inf
      %v261 = vsel %vm260, %v176, %v259
      %vm262 = vcmp.eq.f32.partialorder %v176, 0.0
      %v263 = vand.u32 %v176, 2147483648
      %v264 = vsel %vm262, %v263, %v261
      %v265 = vrsqrt.pop %v179
      %v266 = vmul.f32 %v179, %v265
      %vm267 = vcmp.eq.f32.partialorder %v179, inf
      %v268 = vsel %vm267, %v179, %v266
      %vm269 = vcmp.eq.f32.partialorder %v179, 0.0
      %v270 = vand.u32 %v179, 2147483648
      %v271 = vsel %vm269, %v270, %v268
      %v272 = vrsqrt.pop %v182
      %v273 = vmul.f32 %v182, %v272
      %vm274 = vcmp.eq.f32.partialorder %v182, inf
      %v275 = vsel %vm274, %v182, %v273
      %vm276 = vcmp.eq.f32.partialorder %v182, 0.0
      %v277 = vand.u32 %v182, 2147483648
      %v278 = vsel %vm276, %v277, %v275
      %v279 = vrsqrt.pop %v185
      %v280 = vmul.f32 %v185, %v279
      %vm281 = vcmp.eq.f32.partialorder %v185, inf
      %v282 = vsel %vm281, %v185, %v280
      %vm283 = vcmp.eq.f32.partialorder %v185, 0.0
      %v284 = vand.u32 %v185, 2147483648
      %v285 = vsel %vm283, %v284, %v282
      %v286 = vrsqrt.pop %v188
      %v287 = vmul.f32 %v188, %v286
      %vm288 = vcmp.eq.f32.partialorder %v188, inf
      %v289 = vsel %vm288, %v188, %v287
      %vm290 = vcmp.eq.f32.partialorder %v188, 0.0
      %v291 = vand.u32 %v188, 2147483648
      %v292 = vsel %vm290, %v291, %v289
      %v293 = vrsqrt.pop %v191
      %v294 = vmul.f32 %v191, %v293
      %vm295 = vcmp.eq.f32.partialorder %v191, inf
      %v296 = vsel %vm295, %v191, %v294
      %vm297 = vcmp.eq.f32.partialorder %v191, 0.0
      %v298 = vand.u32 %v191, 2147483648
      %v299 = vsel %vm297, %v298, %v296
      %v300 = vrsqrt.pop %v194
      %v301 = vmul.f32 %v194, %v300
      %vm302 = vcmp.eq.f32.partialorder %v194, inf
      %v303 = vsel %vm302, %v194, %v301
      %vm304 = vcmp.eq.f32.partialorder %v194, 0.0
      %v305 = vand.u32 %v194, 2147483648
      %v306 = vsel %vm304, %v305, %v303
      %v307 = vrsqrt.pop %v197
      %v308 = vmul.f32 %v197, %v307
      %vm309 = vcmp.eq.f32.partialorder %v197, inf
      %v310 = vsel %vm309, %v197, %v308
      %vm311 = vcmp.eq.f32.partialorder %v197, 0.0
      %v312 = vand.u32 %v197, 2147483648
      %v313 = vsel %vm311, %v312, %v310
      %v314 = vrsqrt.pop %v200
      %v315 = vmul.f32 %v200, %v314
      %vm316 = vcmp.eq.f32.partialorder %v200, inf
      %v317 = vsel %vm316, %v200, %v315
      %vm318 = vcmp.eq.f32.partialorder %v200, 0.0
      %v319 = vand.u32 %v200, 2147483648
      %v320 = vsel %vm318, %v319, %v317
      %v321 = vrsqrt.pop %v203
      %v322 = vmul.f32 %v203, %v321
      %vm323 = vcmp.eq.f32.partialorder %v203, inf
      %v324 = vsel %vm323, %v203, %v322
      %vm325 = vcmp.eq.f32.partialorder %v203, 0.0
      %v326 = vand.u32 %v203, 2147483648
      %v327 = vsel %vm325, %v326, %v324
      %v328 = vrsqrt.pop %v206
      %v329 = vmul.f32 %v206, %v328
      %vm330 = vcmp.eq.f32.partialorder %v206, inf
      %v331 = vsel %vm330, %v206, %v329
      %vm332 = vcmp.eq.f32.partialorder %v206, 0.0
      %v333 = vand.u32 %v206, 2147483648
      %v334 = vsel %vm332, %v333, %v331
      %v335 = vrsqrt.pop %v209
      %v336 = vmul.f32 %v209, %v335
      %vm337 = vcmp.eq.f32.partialorder %v209, inf
      %v338 = vsel %vm337, %v209, %v336
      %vm339 = vcmp.eq.f32.partialorder %v209, 0.0
      %v340 = vand.u32 %v209, 2147483648
      %v341 = vsel %vm339, %v340, %v338
      %v342 = vrsqrt.pop %v212
      %v343 = vmul.f32 %v212, %v342
      %vm344 = vcmp.eq.f32.partialorder %v212, inf
      %v345 = vsel %vm344, %v212, %v343
      %vm346 = vcmp.eq.f32.partialorder %v212, 0.0
      %v347 = vand.u32 %v212, 2147483648
      %v348 = vsel %vm346, %v347, %v345
      %v349 = vrsqrt.pop %v215
      %v350 = vmul.f32 %v215, %v349
      %vm351 = vcmp.eq.f32.partialorder %v215, inf
      %v352 = vsel %vm351, %v215, %v350
      %vm353 = vcmp.eq.f32.partialorder %v215, 0.0
      %v354 = vand.u32 %v215, 2147483648
      %v355 = vsel %vm353, %v354, %v352
      %v356 = vrsqrt.pop %v218
      %v357 = vmul.f32 %v218, %v356
      %vm358 = vcmp.eq.f32.partialorder %v218, inf
      %v359 = vsel %vm358, %v218, %v357
      %vm360 = vcmp.eq.f32.partialorder %v218, 0.0
      %v361 = vand.u32 %v218, 2147483648
      %v362 = vsel %vm360, %v361, %v359
      %v363 = vrsqrt.pop %v221
      %v364 = vmul.f32 %v221, %v363
      %vm365 = vcmp.eq.f32.partialorder %v221, inf
      %v366 = vsel %vm365, %v221, %v364
      %vm367 = vcmp.eq.f32.partialorder %v221, 0.0
      %v368 = vand.u32 %v221, 2147483648
      %v369 = vsel %vm367, %v368, %v366
      %v370 = vrsqrt.pop %v224
      %v371 = vmul.f32 %v224, %v370
      %vm372 = vcmp.eq.f32.partialorder %v224, inf
      %v373 = vsel %vm372, %v224, %v371
      %vm374 = vcmp.eq.f32.partialorder %v224, 0.0
      %v375 = vand.u32 %v224, 2147483648
      %v376 = vsel %vm374, %v375, %v373
      %v377 = vrsqrt.pop %v227
      %v378 = vmul.f32 %v227, %v377
      %vm379 = vcmp.eq.f32.partialorder %v227, inf
      %v380 = vsel %vm379, %v227, %v378
      %vm381 = vcmp.eq.f32.partialorder %v227, 0.0
      %v382 = vand.u32 %v227, 2147483648
      %v383 = vsel %vm381, %v382, %v380
      %v384 = vrsqrt.pop %v230
      %v385 = vmul.f32 %v230, %v384
      %vm386 = vcmp.eq.f32.partialorder %v230, inf
      %v387 = vsel %vm386, %v230, %v385
      %vm388 = vcmp.eq.f32.partialorder %v230, 0.0
      %v389 = vand.u32 %v230, 2147483648
      %v390 = vsel %vm388, %v389, %v387
      %v391 = vrsqrt.pop %v233
      %v392 = vmul.f32 %v233, %v391
      %vm393 = vcmp.eq.f32.partialorder %v233, inf
      %v394 = vsel %vm393, %v233, %v392
      %vm395 = vcmp.eq.f32.partialorder %v233, 0.0
      %v396 = vand.u32 %v233, 2147483648
      %v397 = vsel %vm395, %v396, %v394
      %v398 = vrsqrt.pop %v236
      %v399 = vmul.f32 %v236, %v398
      %vm400 = vcmp.eq.f32.partialorder %v236, inf
      %v401 = vsel %vm400, %v236, %v399
      %vm402 = vcmp.eq.f32.partialorder %v236, 0.0
      %v403 = vand.u32 %v236, 2147483648
      %v404 = vsel %vm402, %v403, %v401
      %v405 = vrsqrt.pop %v239
      %v406 = vmul.f32 %v239, %v405
      %vm407 = vcmp.eq.f32.partialorder %v239, inf
      %v408 = vsel %vm407, %v239, %v406
      %vm409 = vcmp.eq.f32.partialorder %v239, 0.0
      %v410 = vand.u32 %v239, 2147483648
      %v411 = vsel %vm409, %v410, %v408
      %v412 = vrsqrt.pop %v243
      %v413 = vmul.f32 %v243, %v412
      %vm414 = vcmp.eq.f32.partialorder %v243, inf
      %v415 = vsel %vm414, %v243, %v413
      %vm416 = vcmp.eq.f32.partialorder %v243, 0.0
      %v417 = vand.u32 %v243, 2147483648
      %v418 = vsel %vm416, %v417, %v415
      %v419 = vadd.f32 %v170, 1.0
      %v420 = vadd.f32 %v173, 1.0
      %v421 = vadd.f32 %v176, 1.0
      %v422 = vadd.f32 %v179, 1.0
      %v423 = vadd.f32 %v182, 1.0
      %v424 = vadd.f32 %v185, 1.0
      %v425 = vadd.f32 %v188, 1.0
      %v426 = vadd.f32 %v191, 1.0
      %v427 = vadd.f32 %v194, 1.0
      %v428 = vadd.f32 %v197, 1.0
      %v429 = vadd.f32 %v200, 1.0
      %v430 = vadd.f32 %v203, 1.0
      %v431 = vadd.f32 %v206, 1.0
      %v432 = vadd.f32 %v209, 1.0
      %v433 = vadd.f32 %v212, 1.0
      %v434 = vadd.f32 %v215, 1.0
      %v435 = vadd.f32 %v218, 1.0
      %v436 = vadd.f32 %v221, 1.0
      %v437 = vadd.f32 %v224, 1.0
      %v438 = vadd.f32 %v227, 1.0
      %v439 = vadd.f32 %v230, 1.0
      %v440 = vadd.f32 %v233, 1.0
      %v441 = vadd.f32 %v236, 1.0
      %v442 = vadd.f32 %v239, 1.0
      %v443 = vadd.f32 %v243, 1.0
      %v444 = vrcp.pop %v419
      %v445 = vrcp.pop %v420
      %v446 = vrcp.pop %v421
      %v447 = vrcp.pop %v422
      %v448 = vrcp.pop %v423
      %v449 = vrcp.pop %v424
      %v450 = vrcp.pop %v425
      %v451 = vrcp.pop %v426
      %v452 = vrcp.pop %v427
      %v453 = vrcp.pop %v428
      %v454 = vrcp.pop %v429
      %v455 = vrcp.pop %v430
      %v456 = vrcp.pop %v431
      %v457 = vrcp.pop %v432
      %v458 = vrcp.pop %v433
      %v459 = vrcp.pop %v434
      %v460 = vrcp.pop %v435
      %v461 = vrcp.pop %v436
      %v462 = vrcp.pop %v437
      %v463 = vrcp.pop %v438
      %v464 = vrcp.pop %v439
      %v465 = vrcp.pop %v440
      %v466 = vrcp.pop %v441
      %v467 = vrcp.pop %v442
      %v468 = vrcp.pop %v443
      %v469 = vmul.f32 %v250, %v444
      %v470 = vmul.f32 %v257, %v445
      %v471 = vmul.f32 %v264, %v446
      %v472 = vmul.f32 %v271, %v447
      %v473 = vmul.f32 %v278, %v448
      %v474 = vmul.f32 %v285, %v449
      %v475 = vmul.f32 %v292, %v450
      %v476 = vmul.f32 %v299, %v451
      %v477 = vmul.f32 %v306, %v452
      %v478 = vmul.f32 %v313, %v453
      %v479 = vmul.f32 %v320, %v454
      %v480 = vmul.f32 %v327, %v455
      %v481 = vmul.f32 %v334, %v456
      %v482 = vmul.f32 %v341, %v457
      %v483 = vmul.f32 %v348, %v458
      %v484 = vmul.f32 %v355, %v459
      %v485 = vmul.f32 %v362, %v460
      %v486 = vmul.f32 %v369, %v461
      %v487 = vmul.f32 %v376, %v462
      %v488 = vmul.f32 %v383, %v463
      %v489 = vmul.f32 %v390, %v464
      %v490 = vmul.f32 %v397, %v465
      %v491 = vmul.f32 %v404, %v466
      %v492 = vmul.f32 %v411, %v467
      %v493 = vmul.f32 %v418, %v468
      %v494 = vmul.f32 %v117, %v469
      %v495 = vmul.f32 %v118, %v470
      %v496 = vmul.f32 %v119, %v471
      %v497 = vmul.f32 %v120, %v472
      %v498 = vmul.f32 %v121, %v473
      %v499 = vmul.f32 %v122, %v474
      %v500 = vmul.f32 %v123, %v475
      %v501 = vmul.f32 %v124, %v476
      %v502 = vmul.f32 %v125, %v477
      %v503 = vmul.f32 %v126, %v478
      %v504 = vmul.f32 %v127, %v479
      %v505 = vmul.f32 %v128, %v480
      %v506 = vmul.f32 %v129, %v481
      %v507 = vmul.f32 %v130, %v482
      %v508 = vmul.f32 %v131, %v483
      %v509 = vmul.f32 %v132, %v484
      %v510 = vmul.f32 %v133, %v485
      %v511 = vmul.f32 %v134, %v486
      %v512 = vmul.f32 %v135, %v487
      %v513 = vmul.f32 %v136, %v488
      %v514 = vmul.f32 %v137, %v489
      %v515 = vmul.f32 %v138, %v490
      %v516 = vmul.f32 %v139, %v491
      %v517 = vmul.f32 %v140, %v492
      %v518 = vmul.f32 %v141, %v493
      %519 = vst.msk [vmem:[%s116] sm:$0xff] %vm167, %v494
      %520 = vst.msk [vmem:[%s116 + $0x8] sm:$0xff] %vm167, %v495
      %521 = vst.msk [vmem:[%s116 + $0x10] sm:$0xff] %vm167, %v496
      %522 = vst.msk [vmem:[%s116 + $0x18] sm:$0xff] %vm167, %v497
      %523 = vst.msk [vmem:[%s116 + $0x20] sm:$0xff] %vm167, %v498
      %524 = vst.msk [vmem:[%s116 + $0x28] sm:$0xff] %vm167, %v499
      %525 = vst.msk [vmem:[%s116 + $0x30] sm:$0xff] %vm167, %v500
      %526 = vst.msk [vmem:[%s116 + $0x38] sm:$0xff] %vm167, %v501
      %527 = vst.msk [vmem:[%s116 + $0x40] sm:$0xff] %vm167, %v502
      %528 = vst.msk [vmem:[%s116 + $0x48] sm:$0xff] %vm167, %v503
      %529 = vst.msk [vmem:[%s116 + $0x50] sm:$0xff] %vm167, %v504
      %530 = vst.msk [vmem:[%s116 + $0x58] sm:$0xff] %vm167, %v505
      %531 = vst.msk [vmem:[%s116 + $0x60] sm:$0xff] %vm167, %v506
      %532 = vst.msk [vmem:[%s116 + $0x68] sm:$0xff] %vm167, %v507
      %533 = vst.msk [vmem:[%s116 + $0x70] sm:$0xff] %vm167, %v508
      %534 = vst.msk [vmem:[%s116 + $0x78] sm:$0xff] %vm167, %v509
      %535 = vst.msk [vmem:[%s116 + $0x80] sm:$0xff] %vm167, %v510
      %536 = vst.msk [vmem:[%s116 + $0x88] sm:$0xff] %vm167, %v511
      %537 = vst.msk [vmem:[%s116 + $0x90] sm:$0xff] %vm167, %v512
      %538 = vst.msk [vmem:[%s116 + $0x98] sm:$0xff] %vm167, %v513
      %539 = vst.msk [vmem:[%s116 + $0xa0] sm:$0xff] %vm167, %v514
      %540 = vst.msk [vmem:[%s116 + $0xa8] sm:$0xff] %vm167, %v515
      %541 = vst.msk [vmem:[%s116 + $0xb0] sm:$0xff] %vm167, %v516
      %542 = vst.msk [vmem:[%s116 + $0xb8] sm:$0xff] %vm167, %v517
      %543 = vst.msk [vmem:[%s116 + $0xc0] sm:$0xf] %vm240, %v518
      %p544 = scmp.lt.s32.totalorder %s12, 1
      %s545 = scalar_select %p544, %s12, 1
      %s546 = smul.addr %s545, 25
      %s547 = smul.addr %s546, 8
      %s548 = scalar_lea.vmem %s1, %s547
      // Predicated region
      $region25: #{primary_caps_forward.3} parent=23 // pred_check
        %p549 = pneg %p56
      $region26: #{primary_caps_forward.3} parent=23 // pred_check_branch
        %551 = sbr.rel (%p549) target = $region28
      $region27: #{primary_caps_forward.3} parent=23 // pred_region
        _
      $region28: #{primary_caps_forward.3} parent=23 // pred_fallthru
        _
    $region24: #{primary_caps_forward.3} parent=5 // pred_fallthru
      _
    %p552 = scmp.le.s32.totalorder 2, %s7
    // Predicated region
    $region29: #{primary_caps_forward.3} parent=5 // pred_check
      %p553 = pneg %p552
    $region30: #{primary_caps_forward.3} parent=5 // pred_check_branch
      %555 = sbr.rel (%p553) target = $region32
    $region31: #{primary_caps_forward.3} parent=5 // pred_region
      %s556 = ssub.s32 %s7, 2
      // Predicated region
      $region33: #{primary_caps_forward.3} parent=31 // pred_check
        %p557 = pneg %p62
      $region34: #{primary_caps_forward.3} parent=31 // pred_check_branch
        %559 = sbr.rel (%p557) target = $region36
      $region35: #{primary_caps_forward.3} parent=31 // pred_region
        %p560 = scmp.lt.s32.totalorder %s13, 1
        %s561 = scalar_select %p560, %s13, 1
        %s562 = smul.addr %s561, 25
        %s563 = smul.addr %s562, 8
        %s564 = scalar_lea.vmem %s1, %s563
      $region36: #{primary_caps_forward.3} parent=31 // pred_fallthru
        _
    $region32: #{primary_caps_forward.3} parent=5 // pred_fallthru
      _
  $region6: #{primary_caps_forward.3} parent=0 // loop_footer
    %s11 = sadd.s32 1, %s7
  $region7: #{primary_caps_forward.3} parent=0 // loop_footer_branch
    %6 = sbr.rel target = $region3
  $region8: #{primary_caps_forward.3} parent=0 // loop_exit
    _

// kernel: primary_caps_forward.2
$region0: #{primary_caps_forward.2}
  #allocation0 [shape = 'u32[]', space=smem, size = 0x4, offset = 0x4, fixed_abs, tag = 'smem constant byte address 0x4 - core index']
  #allocation1 [shape = 'u32[144,128]{1,0:T(1,128)}', space=vmem, size = 0x12000, scoped, tag = 'internal scratch']
  #allocation2 [shape = 'f32[32,49]{1,0:T(8,128)}', space=vmem, size = 0x4000, scoped, tag = 'scratch operand']
  %s0 = inlined_call_operand.vmem [shape: bf16[32,128], index: 0, kind: input, shape index: {}]
  %s1 = inlined_call_operand.vmem [shape: bf16[2,128,49], index: 1, kind: input, shape index: {}]
  %s2 = inlined_call_operand.vmem [shape: f32[32,1], index: 2, kind: input, shape index: {}]
  %s3 = inlined_call_operand.vmem [shape: f32[2,32,49], index: 3, kind: output, shape index: {}]
  %s4 = sld [smem:[#allocation0]]
  $region53: #{primary_caps_forward.2} parent=0
    _
  %s6 = ssub.s32 1, %s4
  %s7 = scalar_select 0, %s6, %s4
  loop: start=0, step=1, limit=4
  $region2: #{primary_caps_forward.2} parent=0 // loop_pre_header
    _
  $region3: #{primary_caps_forward.2} parent=0 // loop_header
    %s9 = sphi 0, %s13
    %p10 = scmp.ge.s32.totalorder %s9, 4
    %s16 = sphi 0, %s28
    %s17 = sphi 0, %s24
    %s18 = sphi 0, %s16
    %s19 = sphi 0, %s17
    %s20 = sphi 0, %s18
    %s21 = sphi 0, %s19
    %s31 = sphi 0, %s33
    %s34 = sphi 0, %s31
    %s35 = sphi 0, %s34
    %s51 = sphi 0, %s35
    %s59 = sphi 0, %s61
    %s62 = sphi 0, %s59
    %s63 = sphi 0, %s62
    %s79 = sphi 0, %s63
    %s83 = sphi 0, %s83
    %s85 = sphi 0, %s83
    %s86 = sphi 0, %s85
    %s100 = sphi 0, %s86
    %s106 = sphi 0, %s108
    %s109 = sphi 0, %s106
    %s110 = sphi 0, %s109
    %s126 = sphi 0, %s110
  $region4: #{primary_caps_forward.2} parent=0 // loop_header_branch
    %12 = sbr.rel (%p10) target = $region8
  $region5: #{primary_caps_forward.2} parent=0 // loop_body
    %s14 = ssub.s32 %s9, 1
    %s15 = ssub.s32 %s9, 2
    %s22 = sadd.s32 1, %s17
    %p23 = scmp.ge.s32.totalorder %s22, 1
    %s24 = scalar_select %p23, 0, %s22
    %s25 = sadd.s32 1, %s16
    %s26 = scalar_select %p23, %s25, %s16
    %p27 = scmp.ge.s32.totalorder %s26, 2
    %s28 = scalar_select %p27, 0, %s26
    %s29 = ssub.s32 %s17, %s24
    %p30 = scmp.eq.s32.totalorder %s29, 0
    %s32 = sadd.s32 %s31, 1
    %s33 = scalar_select %p30, %s31, %s32
    %p36 = pneg %p30
    %p37 = scmp.eq.s32.totalorder %s9, 1
    %p38 = por %p36, %p37
    %p39 = scmp.ne.s32.totalorder %s31, %s34
    %p40 = scmp.eq.s32.totalorder %s9, 0
    %p41 = por %p39, %p40
    %p42 = scmp.ne.s32.totalorder %s31, %s34
    %p43 = scmp.eq.s32.totalorder %s14, 1
    %p44 = por %p42, %p43
    %p45 = scmp.ne.s32.totalorder %s34, %s35
    %p46 = scmp.eq.s32.totalorder %s14, 0
    %p47 = por %p45, %p46
    %p48 = scmp.ne.s32.totalorder %s34, %s35
    %p49 = scmp.eq.s32.totalorder %s15, 1
    %p50 = por %p48, %p49
    %p52 = scmp.ne.s32.totalorder %s35, %s51
    %p53 = scmp.eq.s32.totalorder %s15, 0
    %p54 = por %p52, %p53
    %s55 = ssub.s32 %s16, %s28
    %s56 = ssub.s32 %s17, %s24
    %s57 = sor.u32 %s55, %s56
    %p58 = scmp.eq.s32.totalorder %s57, 0
    %s60 = sadd.s32 %s59, 1
    %s61 = scalar_select %p58, %s59, %s60
    %p64 = pneg %p58
    %p65 = scmp.eq.s32.totalorder %s9, 1
    %p66 = por %p64, %p65
    %p67 = scmp.ne.s32.totalorder %s59, %s62
    %p68 = scmp.eq.s32.totalorder %s9, 0
    %p69 = por %p67, %p68
    %p70 = scmp.ne.s32.totalorder %s59, %s62
    %p71 = scmp.eq.s32.totalorder %s14, 1
    %p72 = por %p70, %p71
    %p73 = scmp.ne.s32.totalorder %s62, %s63
    %p74 = scmp.eq.s32.totalorder %s14, 0
    %p75 = por %p73, %p74
    %p76 = scmp.ne.s32.totalorder %s62, %s63
    %p77 = scmp.eq.s32.totalorder %s15, 1
    %p78 = por %p76, %p77
    %p80 = scmp.ne.s32.totalorder %s63, %s79
    %p81 = scmp.eq.s32.totalorder %s15, 0
    %p82 = por %p80, %p81
    %s84 = sadd.s32 %s83, 1
    %p87 = scmp.eq.s32.totalorder %s9, 1
    %p88 = scmp.ne.s32.totalorder %s83, %s85
    %p89 = scmp.eq.s32.totalorder %s9, 0
    %p90 = por %p88, %p89
    %p91 = scmp.ne.s32.totalorder %s83, %s85
    %p92 = scmp.eq.s32.totalorder %s14, 1
    %p93 = por %p91, %p92
    %p94 = scmp.ne.s32.totalorder %s85, %s86
    %p95 = scmp.eq.s32.totalorder %s14, 0
    %p96 = por %p94, %p95
    %p97 = scmp.ne.s32.totalorder %s85, %s86
    %p98 = scmp.eq.s32.totalorder %s15, 1
    %p99 = por %p97, %p98
    %p101 = scmp.ne.s32.totalorder %s86, %s100
    %p102 = scmp.eq.s32.totalorder %s15, 0
    %p103 = por %p101, %p102
    %s104 = ssub.s32 %s16, %s28
    %p105 = scmp.eq.s32.totalorder %s104, 0
    %s107 = sadd.s32 %s106, 1
    %s108 = scalar_select %p105, %s106, %s107
    %p111 = pneg %p105
    %p112 = scmp.eq.s32.totalorder %s9, 1
    %p113 = por %p111, %p112
    %p114 = scmp.ne.s32.totalorder %s106, %s109
    %p115 = scmp.eq.s32.totalorder %s9, 0
    %p116 = por %p114, %p115
    %p117 = scmp.ne.s32.totalorder %s106, %s109
    %p118 = scmp.eq.s32.totalorder %s14, 1
    %p119 = por %p117, %p118
    %p120 = scmp.ne.s32.totalorder %s109, %s110
    %p121 = scmp.eq.s32.totalorder %s14, 0
    %p122 = por %p120, %p121
    %p123 = scmp.ne.s32.totalorder %s109, %s110
    %p124 = scmp.eq.s32.totalorder %s15, 1
    %p125 = por %p123, %p124
    %p127 = scmp.ne.s32.totalorder %s110, %s126
    %p128 = scmp.eq.s32.totalorder %s15, 0
    %p129 = por %p127, %p128
    %p130 = scmp.le.s32.totalorder 1, %s9
    %p131 = scmp.lt.s32.totalorder %s9, 3
    %p132 = pnand %p130, %p131
    %p133 = pneg %p132
    // Predicated region
    $region9: #{primary_caps_forward.2} parent=5 // pred_check
      _
    $region10: #{primary_caps_forward.2} parent=5 // pred_check_branch
      %135 = sbr.rel (%p132) target = $region12
    $region11: #{primary_caps_forward.2} parent=5 // pred_region
      %s136 = ssub.s32 %s9, 1
      // Predicated region
      $region13: #{primary_caps_forward.2} parent=11 // pred_check
        %p137 = pneg %p47
      $region14: #{primary_caps_forward.2} parent=11 // pred_check_branch
        %139 = sbr.rel (%p137) target = $region16
      $region15: #{primary_caps_forward.2} parent=11 // pred_region
        %p140 = scmp.lt.s32.totalorder %s19, 0
        %s141 = scalar_select %p140, %s19, 0
        %s142 = smul.addr %s141, 4
        %s143 = scalar_lea.vmem %s0, %s142
      $region16: #{primary_caps_forward.2} parent=11 // pred_fallthru
        _
      // Predicated region
      $region17: #{primary_caps_forward.2} parent=11 // pred_check
        %p144 = pneg %p96
      $region18: #{primary_caps_forward.2} parent=11 // pred_check_branch
        %146 = sbr.rel (%p144) target = $region20
      $region19: #{primary_caps_forward.2} parent=11 // pred_region
        _
      $region20: #{primary_caps_forward.2} parent=11 // pred_fallthru
        _
    $region12: #{primary_caps_forward.2} parent=5 // pred_fallthru
      _
    %p147 = scmp.lt.s32.totalorder %s9, 2
    // Predicated region
    $region21: #{primary_caps_forward.2} parent=5 // pred_check
      %p148 = pneg %p147
    $region22: #{primary_caps_forward.2} parent=5 // pred_check_branch
      %150 = sbr.rel (%p148) target = $region24
    $region23: #{primary_caps_forward.2} parent=5 // pred_region
      // Predicated region
      $region25: #{primary_caps_forward.2} parent=23 // pred_check
        %p151 = pneg %p69
      $region26: #{primary_caps_forward.2} parent=23 // pred_check_branch
        %153 = sbr.rel (%p151) target = $region28
      $region27: #{primary_caps_forward.2} parent=23 // pred_region
        %s154 = smul.u32 16, %s17
        %p155 = scmp.lt.s32.totalorder %s16, 1
        %s156 = scalar_select %p155, %s16, 1
        %p157 = scmp.lt.s32.totalorder %s154, 15
        %s158 = scalar_select %p157, %s154, 15
        %s159 = smul.addr %s156, 16
        %s160 = sadd.s32 %s158, %s159
        %s161 = smul.addr %s160, 4
        %s162 = scalar_lea.vmem %s1, %s161
        %s163 = smul.u32 16, %s17
      $region28: #{primary_caps_forward.2} parent=23 // pred_fallthru
        _
    $region24: #{primary_caps_forward.2} parent=5 // pred_fallthru
      _
    %p164 = scmp.le.s32.totalorder 1, %s9
    %p165 = scmp.lt.s32.totalorder %s9, 3
    %p166 = pnand %p164, %p165
    %p167 = pneg %p166
    // Predicated region
    $region29: #{primary_caps_forward.2} parent=5 // pred_check
      _
    $region30: #{primary_caps_forward.2} parent=5 // pred_check_branch
      %169 = sbr.rel (%p166) target = $region32
    $region31: #{primary_caps_forward.2} parent=5 // pred_region
      %s170 = ssub.s32 %s9, 1
      %p171 = scmp.lt.s32.totalorder %s19, 0
      %s172 = scalar_select %p171, %s19, 0
      %s173 = smul.addr %s172, 4
      %s174 = scalar_lea.vmem %s0, %s173
      %p175 = pneg %p47
      %p176 = pneg %p44
      %s177 = smul.u32 16, %s19
      %p178 = scmp.lt.s32.totalorder %s18, 1
      %s179 = scalar_select %p178, %s18, 1
      %p180 = scmp.lt.s32.totalorder %s177, 15
      %s181 = scalar_select %p180, %s177, 15
      %s182 = smul.addr %s179, 16
      %s183 = sadd.s32 %s181, %s182
      %s184 = smul.addr %s183, 4
      %s185 = scalar_lea.vmem %s1, %s184
      %p186 = pneg %p75
      %p187 = pneg %p72
      %p188 = pneg %p96
      %p189 = pneg %p93
      %p190 = pneg %p122
      %p191 = pneg %p119
      %p192 = scmp.lt.s32.totalorder %s18, 1
      %s193 = scalar_select %p192, %s18, 1
      %s194 = smul.addr %s193, 4
      %s195 = smul.addr %s194, 8
      %s196 = scalar_lea.vmem %s3, %s195
      %p197 = scmp.lt.s32.totalorder %s19, 0
      %s198 = scalar_select %p197, %s19, 0
      %s199 = smul.addr %s198, 4
      %s200 = scalar_lea.vmem %s0, %s199
      %s201 = smul.u32 16, %s19
      %p202 = scmp.lt.s32.totalorder %s18, 1
      %s203 = scalar_select %p202, %s18, 1
      %p204 = scmp.lt.s32.totalorder %s201, 15
      %s205 = scalar_select %p204, %s201, 15
      %s206 = smul.addr %s203, 16
      %s207 = sadd.s32 %s205, %s206
      %s208 = smul.addr %s207, 4
      %s209 = scalar_lea.vmem %s1, %s208
      %s210 = smul.u32 16, %s19
      %p211 = scmp.lt.s32.totalorder %s18, 1
      %s212 = scalar_select %p211, %s18, 1
      %s213 = smul.addr %s212, 4
      %s214 = smul.addr %s213, 8
      %s215 = scalar_lea.vmem %s3, %s214
      %p217 = scmp.eq.s32.totalorder %s19, 0
      // Predicated region
      $region33: #{primary_caps_forward.2} parent=31 // pred_check
        %p218 = pneg %p217
      $region34: #{primary_caps_forward.2} parent=31 // pred_check_branch
        %220 = sbr.rel (%p218) target = $region36
      $region35: #{primary_caps_forward.2} parent=31 // pred_region
        %vm221 = vcmask 400384
        %222 = vst.msk [vmem:[#allocation2] sm:$0xff] %vm221, 0.0
        %223 = vst.msk [vmem:[#allocation2 + $0x8] sm:$0xff] %vm221, 0.0
        %224 = vst.msk [vmem:[#allocation2 + $0x10] sm:$0xff] %vm221, 0.0
        %225 = vst.msk [vmem:[#allocation2 + $0x18] sm:$0xff] %vm221, 0.0
      $region36: #{primary_caps_forward.2} parent=31 // pred_fallthru
        _
      %v226 = vld [vmem:[#allocation2] sm:$0xff]
      %v227 = vld [vmem:[#allocation2 + $0x8] sm:$0xff]
      %v228 = vld [vmem:[#allocation2 + $0x10] sm:$0xff]
      %v229 = vld [vmem:[#allocation2 + $0x18] sm:$0xff]
      %v230 = vld [vmem:[%s200] sm:$0xf]
      %v231 = vld [vmem:[%s200 + $0x4] sm:$0xf]
      %v232 = vld [vmem:[%s200 + $0x8] sm:$0xf]
      %v233 = vld [vmem:[%s200 + $0xc] sm:$0xf]
      %v234 = vld [vmem:[%s209] sm:$0xf]
      %v235 = vld [vmem:[%s209 + $0x4] sm:$0xf]
      %v236 = vld [vmem:[%s209 + $0x8] sm:$0xf]
      %v237 = vld [vmem:[%s209 + $0xc] sm:$0xf]
      %v238 = vld [vmem:[%s209 + $0x10] sm:$0xf]
      %v239 = vld [vmem:[%s209 + $0x14] sm:$0xf]
      %v240 = vld [vmem:[%s209 + $0x18] sm:$0xf]
      %v241 = vld [vmem:[%s209 + $0x1c] sm:$0xf]
      %v242 = vld [vmem:[%s209 + $0x20] sm:$0xf]
      %v243 = vld [vmem:[%s209 + $0x24] sm:$0xf]
      %v244 = vld [vmem:[%s209 + $0x28] sm:$0xf]
      %v245 = vld [vmem:[%s209 + $0x2c] sm:$0xf]
      %v246 = vld [vmem:[%s209 + $0x30] sm:$0xf]
      %v247 = vld [vmem:[%s209 + $0x34] sm:$0xf]
      %v248 = vld [vmem:[%s209 + $0x38] sm:$0xf]
      %v249 = vld [vmem:[%s209 + $0x3c] sm:$0xf]
      %v254 = vunpack.c.l.b16 %v230
      %v255 = vunpack.c.l.b16 %v231
      %v256 = vunpack.c.l.b16 %v232
      %v257 = vunpack.c.l.b16 %v233
      %v258 = vpack.c.b16 %v255, %v254
      %v259 = vpack.c.b16 %v257, %v256
      %v278 = vunpack.c.l.b16 %v234
      %v279 = vunpack.c.l.b16 %v235
      %v280 = vunpack.c.l.b16 %v236
      %v281 = vunpack.c.l.b16 %v237
      %v282 = vunpack.c.l.b16 %v238
      %v283 = vunpack.c.l.b16 %v239
      %v284 = vunpack.c.l.b16 %v240
      %v285 = vunpack.c.l.b16 %v241
      %v286 = vunpack.c.l.b16 %v242
      %v287 = vunpack.c.l.b16 %v243
      %v288 = vunpack.c.l.b16 %v244
      %v289 = vunpack.c.l.b16 %v245
      %v290 = vunpack.c.l.b16 %v246
      %v291 = vunpack.c.l.b16 %v247
      %v292 = vunpack.c.l.b16 %v248
      %v293 = vunpack.c.l.b16 %v249
      %v294 = vpack.c.b16 %v279, %v278
      %v295 = vpack.c.b16 %v281, %v280
      %v296 = vpack.c.b16 %v283, %v282
      %v297 = vpack.c.b16 %v285, %v284
      %v298 = vpack.c.b16 %v287, %v286
      %v299 = vpack.c.b16 %v289, %v288
      %v300 = vpack.c.b16 %v291, %v290
      %v301 = vpack.c.b16 %v293, %v292
      %310 = vmatprep.subr.bf16.mxu0 0
      %311 = vmatpush1.bf16.msra.mxu0 %v294
      %312 = vmatprep.subr.bf16.mxu0 0
      %313 = vmatpush1.bf16.msra.mxu0 %v295
      %314 = vmatprep.subr.bf16.mxu0 0
      %315 = vmatpush1.bf16.msra.mxu0 %v296
      %316 = vmatprep.subr.bf16.mxu0 0
      %317 = vmatpush1.bf16.msra.mxu0 %v297
      %318 = vmatprep.subr.bf16.mxu0 0
      %319 = vmatpush1.bf16.msra.mxu0 %v298
      %320 = vmatprep.subr.bf16.mxu0 0
      %321 = vmatpush1.bf16.msra.mxu0 %v299
      %322 = vmatprep.subr.bf16.mxu0 0
      %323 = vmatpush1.bf16.msra.mxu0 %v300
      %324 = vmatprep.subr.bf16.mxu0 0
      %325 = vmatpush1.bf16.msra.mxu0 %v301
      %326 = vmatprep.subr.bf16.mxu0 0
      %327 = vmatpush1.bf16.msra.mxu0 0
      %328 = vmatprep.subr.bf16.mxu0 0
      %329 = vmatpush1.bf16.msra.mxu0 0
      %330 = vmatprep.subr.bf16.mxu0 0
      %331 = vmatpush1.bf16.msra.mxu0 0
      %332 = vmatprep.subr.bf16.mxu0 0
      %333 = vmatpush1.bf16.msra.mxu0 0
      %334 = vmatprep.subr.bf16.mxu0 0
      %335 = vmatpush1.bf16.msra.mxu0 0
      %336 = vmatprep.subr.bf16.mxu0 0
      %337 = vmatpush1.bf16.msra.mxu0 0
      %338 = vmatprep.subr.bf16.mxu0 0
      %339 = vmatpush1.bf16.msra.mxu0 0
      %340 = vmatprep.subr.bf16.mxu0 0
      %341 = vmatpush1.bf16.msra.mxu0 0
      %342 = vmatprep.mubr.bf16.mxu0 0
      %343 = vmatmul.mubr.bf16.gmra.mrb[0].mxu0 %v258
      %v344 = vpop.f32.mrb[0].mxu0
      %v345 = vadd.f32 0.0, %v344
      %v346 = vpop.f32.mrb[0].mxu0
      %v347 = vpop.f32.mrb[0].mxu0
      %v348 = vadd.f32 0.0, %v347
      %v349 = vpop.f32.mrb[0].mxu0
      %350 = vmatprep.mubr.bf16.mxu0 0
      %351 = vmatmul.mubr.bf16.gmra.mrb[0].mxu0 %v259
      %v352 = vpop.f32.mrb[0].mxu0
      %v353 = vadd.f32 0.0, %v352
      %v354 = vpop.f32.mrb[0].mxu0
      %v355 = vpop.f32.mrb[0].mxu0
      %v356 = vadd.f32 0.0, %v355
      %v357 = vpop.f32.mrb[0].mxu0
      %358 = vdwg.mxu0
      %v359 = vadd.f32 %v226, %v345
      %v360 = vadd.f32 %v227, %v348
      %v361 = vadd.f32 %v228, %v353
      %v362 = vadd.f32 %v229, %v356
      %vm363 = vcmask 400384
      %364 = vst.msk [vmem:[#allocation2] sm:$0xff] %vm363, %v359
      %365 = vst.msk [vmem:[#allocation2 + $0x8] sm:$0xff] %vm363, %v360
      %366 = vst.msk [vmem:[#allocation2 + $0x10] sm:$0xff] %vm363, %v361
      %367 = vst.msk [vmem:[#allocation2 + $0x18] sm:$0xff] %vm363, %v362
      // Predicated region
      $region37: #{primary_caps_forward.2} parent=31 // pred_check
        %p368 = pneg %p217
      $region38: #{primary_caps_forward.2} parent=31 // pred_check_branch
        %370 = sbr.rel (%p368) target = $region40
      $region39: #{primary_caps_forward.2} parent=31 // pred_region
        %v371 = vld [vmem:[#allocation2] sm:$0xff]
        %v372 = vld [vmem:[#allocation2 + $0x8] sm:$0xff]
        %v373 = vld [vmem:[#allocation2 + $0x10] sm:$0xff]
        %v374 = vld [vmem:[#allocation2 + $0x18] sm:$0xff]
        %v375 = vld [vmem:[%s2] sm:$0xff]
        %v376 = vld [vmem:[%s2 + $0x8] sm:$0xff]
        %v377 = vld [vmem:[%s2 + $0x10] sm:$0xff]
        %v378 = vld [vmem:[%s2 + $0x18] sm:$0xff]
        %380 = vset.pattern.permute.xlu0 0
        %381 = vperm.xlu0 %380, %v375
        %v382 = vpop.permute.xlu0 %381
        %385 = vset.pattern.permute.xlu0 0
        %386 = vperm.xlu0 %385, %v376
        %v387 = vpop.permute.xlu0 %386
        %390 = vset.pattern.permute.xlu0 0
        %391 = vperm.xlu0 %390, %v377
        %v392 = vpop.permute.xlu0 %391
        %395 = vset.pattern.permute.xlu0 0
        %396 = vperm.xlu0 %395, %v378
        %v397 = vpop.permute.xlu0 %396
        %v399 = vadd.f32 %v371, %v382
        %v400 = vadd.f32 %v372, %v387
        %v401 = vadd.f32 %v373, %v392
        %v402 = vadd.f32 %v374, %v397
        %403 = vst.msk [vmem:[%s215] sm:$0xff] %vm363, %v399
        %404 = vst.msk [vmem:[%s215 + $0x8] sm:$0xff] %vm363, %v400
        %405 = vst.msk [vmem:[%s215 + $0x10] sm:$0xff] %vm363, %v401
        %406 = vst.msk [vmem:[%s215 + $0x18] sm:$0xff] %vm363, %v402
      $region40: #{primary_caps_forward.2} parent=31 // pred_fallthru
        _
      %p407 = scmp.lt.s32.totalorder %s18, 1
      %s408 = scalar_select %p407, %s18, 1
      %s409 = smul.addr %s408, 4
      %s410 = smul.addr %s409, 8
      %s411 = scalar_lea.vmem %s3, %s410
      // Predicated region
      $region41: #{primary_caps_forward.2} parent=31 // pred_check
        %p412 = pneg %p119
      $region42: #{primary_caps_forward.2} parent=31 // pred_check_branch
        %414 = sbr.rel (%p412) target = $region44
      $region43: #{primary_caps_forward.2} parent=31 // pred_region
        _
      $region44: #{primary_caps_forward.2} parent=31 // pred_fallthru
        _
    $region32: #{primary_caps_forward.2} parent=5 // pred_fallthru
      _
    %p415 = scmp.le.s32.totalorder 2, %s9
    // Predicated region
    $region45: #{primary_caps_forward.2} parent=5 // pred_check
      %p416 = pneg %p415
    $region46: #{primary_caps_forward.2} parent=5 // pred_check_branch
      %418 = sbr.rel (%p416) target = $region48
    $region47: #{primary_caps_forward.2} parent=5 // pred_region
      %s419 = ssub.s32 %s9, 2
      // Predicated region
      $region49: #{primary_caps_forward.2} parent=47 // pred_check
        %p420 = pneg %p125
      $region50: #{primary_caps_forward.2} parent=47 // pred_check_branch
        %422 = sbr.rel (%p420) target = $region52
      $region51: #{primary_caps_forward.2} parent=47 // pred_region
        %p423 = scmp.lt.s32.totalorder %s20, 1
        %s424 = scalar_select %p423, %s20, 1
        %s425 = smul.addr %s424, 4
        %s426 = smul.addr %s425, 8
        %s427 = scalar_lea.vmem %s3, %s426
      $region52: #{primary_caps_forward.2} parent=47 // pred_fallthru
        _
    $region48: #{primary_caps_forward.2} parent=5 // pred_fallthru
      _
  $region6: #{primary_caps_forward.2} parent=0 // loop_footer
    %s13 = sadd.s32 1, %s9
  $region7: #{primary_caps_forward.2} parent=0 // loop_footer_branch
    %8 = sbr.rel target = $region3
  $region8: #{primary_caps_forward.2} parent=0 // loop_exit
    _

</llo_original>
